<compile_context>
chip_gen: v6e
topology: v6e:2x2x1
jax: 0.10.0
libtpu: 0.0.40
codegen_flags: <defaults>
</compile_context>

<pallas_src>
import functools

import jax
import jax.numpy as jnp
from jax.experimental import pallas as pl
from jax.experimental.pallas import tpu as pltpu

LANES = 128
SUBLANES = 8
TARGET_BLOCK_BYTES = 4 * 1024 * 1024      # ~4 MiB native bytes per input block
VMEM_LIMIT_BYTES = 32 * 1024 * 1024       # 2 inputs x 2 bufs x 4 MiB = 16 MiB + slack


def _msle_partial_kernel(pred_ref, actual_ref, o_ref, *,
                         block_rows, total_rows, ragged):
    # Cast in-kernel so HBM->VMEM DMA moves the native (possibly bf16) bytes.
    p = pred_ref[...].astype(jnp.float32)
    a = actual_ref[...].astype(jnp.float32)
    d = jnp.log(p) - jnp.log(a)            # faithful to mse(log(p), log(a))
    sq = d * d

    def _reduce_store(vals):
        if vals.shape[0] % SUBLANES == 0:
            # (block_rows, 128) -> (8, 128): cross-vreg adds on the VPU only.
            part = vals.reshape(-1, SUBLANES, LANES).sum(axis=0)
        else:
            # Tiny single-block fallback (rows not a multiple of 8).
            part = vals.sum(axis=0, keepdims=True)
        o_ref[...] = part[None, :, :]

    if not ragged:
        _reduce_store(sq)
    else:
        # Only the last grid step can read rows past the end of the array
        # (uninitialized VMEM -> possible NaN through log); mask them there
        # and only there.
        last = pl.program_id(0) == (pl.num_programs(0) - 1)

        @pl.when(jnp.logical_not(last))
        def _():
            _reduce_store(sq)

        @pl.when(last)
        def _():
            base = pl.program_id(0) * block_rows
            row = base + jax.lax.broadcasted_iota(
                jnp.int32, (block_rows, 1), 0)          # (block_rows, 1)
            masked = jnp.where(row < total_rows, sq, jnp.float32(0.0))
            _reduce_store(masked)


def msle_loss(pred, actual):
    """Scalar MSLE over all elements of pred/actual (same shape)."""
    assert pred.shape == actual.shape
    n_elem = pred.size
    if n_elem == 0:
        # mean over zero elements -> NaN (matches torch).
        return jnp.float32(float("nan"))

    rem = n_elem % LANES
    if rem == 0:
        # Common case: pure reshape, no extra HBM copies from the wrapper.
        # (Whether XLA needs a relayout copy depends on the producer layout;
        #  audit the HLO if this feeds from an exotic minor-dim layout.)
        p2 = jnp.reshape(pred, (-1, LANES))
        a2 = jnp.reshape(actual, (-1, LANES))
    else:
        # Rare ragged-mod-128 case: pad with ones (log(1)-log(1)=0 -> the pad
        # contributes nothing, so no element mask is needed for it).
        pad = LANES - rem
        p2 = jnp.concatenate(
            [jnp.reshape(pred, (-1,)), jnp.ones((pad,), pred.dtype)]
        ).reshape(-1, LANES)
        a2 = jnp.concatenate(
            [jnp.reshape(actual, (-1,)), jnp.ones((pad,), actual.dtype)]
        ).reshape(-1, LANES)

    rows = p2.shape[0]

    # Dtype-aware block size: ~TARGET_BLOCK_BYTES of native bytes per block,
    # rounded down to a multiple of 8 sublanes.
    itemsize = jnp.dtype(pred.dtype).itemsize
    block_rows = TARGET_BLOCK_BYTES // (LANES * itemsize)
    block_rows = max(SUBLANES, (block_rows // SUBLANES) * SUBLANES)
    if rows <= block_rows:
        block_rows = rows                  # single block == full dims (allowed)

    num_blocks = pl.cdiv(rows, block_rows)
    ragged = (rows % block_rows) != 0
    out_rows = SUBLANES if (block_rows % SUBLANES == 0) else 1

    kernel = functools.partial(
        _msle_partial_kernel,
        block_rows=block_rows, total_rows=rows, ragged=ragged)

    partials = pl.pallas_call(
        kernel,
        out_shape=jax.ShapeDtypeStruct((num_blocks, out_rows, LANES),
                                       jnp.float32),
        grid_spec=pltpu.PrefetchScalarGridSpec(
            num_scalar_prefetch=0,
            grid=(num_blocks,),
            in_specs=[
                pl.BlockSpec((block_rows, LANES), lambda i: (i, 0)),
                pl.BlockSpec((block_rows, LANES), lambda i: (i, 0)),
            ],
            out_specs=pl.BlockSpec((1, out_rows, LANES), lambda i: (i, 0, 0)),
        ),
        compiler_params=pltpu.CompilerParams(
            dimension_semantics=("parallel",),   # independent blocks
            vmem_limit_bytes=VMEM_LIMIT_BYTES,
        ),
    )(p2, a2)

    total = jnp.sum(partials, dtype=jnp.float32)
    return total / jnp.float32(n_elem)


def msle_ref(pred, actual):
    d = jnp.log(pred.astype(jnp.float32)) - jnp.log(actual.astype(jnp.float32))
    return jnp.mean(d * d)


if __name__ == "__main__":
    key = jax.random.PRNGKey(0)
    k1, k2 = jax.random.split(key)
    shape = (2, 4, 16, 16)  # NCHW
    # log() requires positive inputs (same constraint as the PyTorch module).
    pred = jax.random.uniform(k1, shape, jnp.float32, minval=0.1, maxval=5.0)
    actual = jax.random.uniform(k2, shape, jnp.float32, minval=0.1, maxval=5.0)

    loss = jax.block_until_ready(jax.jit(msle_loss)(pred, actual))
    ref = jax.block_until_ready(msle_ref(pred, actual))

    assert jnp.allclose(loss, ref, rtol=1e-5, atol=1e-6), (loss, ref)
    print("KERNEL_OK")
</pallas_src>

<mosaic_0001>
module attributes {stable_mosaic.version = 11 : i64} {
  func.func @_msle_partial_kernel(%arg0: i32, %arg1: memref<16x128xf32, #tpu.memory_space<vmem>>, %arg2: memref<16x128xf32, #tpu.memory_space<vmem>>, %arg3: memref<1x8x128xf32, #tpu.memory_space<vmem>>) attributes {dimension_semantics = [#tpu.dimension_semantics<parallel>], iteration_bounds = array<i64: 1>, scalar_prefetch = 0 : i64, scratch_operands = 0 : i64, tpu.core_type = #tpu.core_type<tc>, window_params = [{transform_indices = @transform_0, window_bounds = array<i64: 16, 128>}, {transform_indices = @transform_1, window_bounds = array<i64: 16, 128>}, {transform_indices = @transform_2, window_bounds = array<i64: 1, 8, 128>}]} {
    %c0 = arith.constant 0 : index
    %c0_0 = arith.constant 0 : index
    %0 = vector.load %arg1[%c0, %c0_0] : memref<16x128xf32, #tpu.memory_space<vmem>>, vector<16x128xf32>
    %c0_1 = arith.constant 0 : index
    %c0_2 = arith.constant 0 : index
    %1 = vector.load %arg2[%c0_1, %c0_2] : memref<16x128xf32, #tpu.memory_space<vmem>>, vector<16x128xf32>
    %2 = math.log %0 : vector<16x128xf32>
    %3 = math.log %1 : vector<16x128xf32>
    %4 = arith.subf %2, %3 : vector<16x128xf32>
    %5 = arith.mulf %4, %4 : vector<16x128xf32>
    %6 = vector.shape_cast %5 : vector<16x128xf32> to vector<2x8x128xf32>
    %cst = arith.constant dense<0.000000e+00> : vector<8x128xf32>
    %7 = vector.multi_reduction <add>, %6, %cst [0] : vector<2x8x128xf32> to vector<8x128xf32>
    %8 = vector.shape_cast %7 : vector<8x128xf32> to vector<1x8x128xf32>
    %c0_3 = arith.constant 0 : index
    %c0_4 = arith.constant 0 : index
    %c0_5 = arith.constant 0 : index
    %9 = vector.load %arg3[%c0_3, %c0_4, %c0_5] : memref<1x8x128xf32, #tpu.memory_space<vmem>>, vector<1x8x128xf32>
    tpu.vector_store %arg3[%c0_3, %c0_4, %c0_5], %8 {strides = array<i32>} : memref<1x8x128xf32, #tpu.memory_space<vmem>>, vector<1x8x128xf32>,
    return
  }
  func.func @transform_0(%arg0: i32) -> (i32, i32) {
    %c0_i32 = arith.constant 0 : i32
    %c0_i32_0 = arith.constant 0 : i32
    return %arg0, %c0_i32 : i32, i32
  }
  func.func @transform_1(%arg0: i32) -> (i32, i32) {
    %c0_i32 = arith.constant 0 : i32
    %c0_i32_0 = arith.constant 0 : i32
    return %arg0, %c0_i32 : i32, i32
  }
  func.func @transform_2(%arg0: i32) -> (i32, i32, i32) {
    %c0_i32 = arith.constant 0 : i32
    %c0_i32_0 = arith.constant 0 : i32
    %c0_i32_1 = arith.constant 0 : i32
    return %arg0, %c0_i32, %c0_i32_0 : i32, i32, i32
  }
}

</mosaic_0001>

<llo_original>
// kernel: msle_loss.1
$region0: #{msle_loss.1}
  #allocation0 [shape = 'u32[]', space=smem, size = 0x4, offset = 0x4, fixed_abs, tag = 'smem constant byte address 0x4 - core index']
  #allocation1 [shape = 'u32[144,128]{1,0:T(1,128)}', space=vmem, size = 0x12000, scoped, tag = 'internal scratch']
  %s0 = inlined_call_operand.vmem [shape: f32[16,128], index: 0, kind: input, shape index: {}]
  %s1 = inlined_call_operand.vmem [shape: f32[16,128], index: 1, kind: input, shape index: {}]
  %s2 = inlined_call_operand.vmem [shape: f32[1,8,128], index: 2, kind: output, shape index: {}]
  %s3 = sld [smem:[#allocation0]]
  $region18: #{msle_loss.1} parent=0
    _
  %s5 = ssub.s32 1, %s3
  %s6 = scalar_select 0, %s5, %s3
  // Predicated region
  $region2: #{msle_loss.1} parent=0 // pred_check
    _
  $region3: #{msle_loss.1} parent=0 // pred_check_branch
    %8 = sbr.rel (0) target = $region5
  $region4: #{msle_loss.1} parent=0 // pred_region
    _
  $region5: #{msle_loss.1} parent=0 // pred_fallthru
    _
  // Predicated region
  $region6: #{msle_loss.1} parent=0 // pred_check
    _
  $region7: #{msle_loss.1} parent=0 // pred_check_branch
    %10 = sbr.rel (0) target = $region9
  $region8: #{msle_loss.1} parent=0 // pred_region
    _
  $region9: #{msle_loss.1} parent=0 // pred_fallthru
    _
  %v11 = vld [vmem:[%s0] sm:$0xff]
  %v12 = vld [vmem:[%s0 + $0x8] sm:$0xff]
  %v13 = vld [vmem:[%s1] sm:$0xff]
  %v14 = vld [vmem:[%s1 + $0x8] sm:$0xff]
  %v15 = vlog2.pop %v11
  %v16 = vmul.f32 %v15, 0.6931472
  %v17 = vlog2.pop %v12
  %v18 = vmul.f32 %v17, 0.6931472
  %v19 = vlog2.pop %v13
  %v20 = vmul.f32 %v19, 0.6931472
  %v21 = vlog2.pop %v14
  %v22 = vmul.f32 %v21, 0.6931472
  %v23 = vsub.f32 %v16, %v20
  %v24 = vsub.f32 %v18, %v22
  %v25 = vmul.f32 %v23, %v23
  %v26 = vmul.f32 %v24, %v24
  %v27 = vadd.f32 %v25, %v26
  %28 = vst [vmem:[%s2] sm:$0xff] %v27
  // Predicated region
  $region10: #{msle_loss.1} parent=0 // pred_check
    _
  $region11: #{msle_loss.1} parent=0 // pred_check_branch
    %30 = sbr.rel (0) target = $region13
  $region12: #{msle_loss.1} parent=0 // pred_region
    _
  $region13: #{msle_loss.1} parent=0 // pred_fallthru
    _
  // Predicated region
  $region14: #{msle_loss.1} parent=0 // pred_check
    _
  $region15: #{msle_loss.1} parent=0 // pred_check_branch
    %32 = sbr.rel (0) target = $region17
  $region16: #{msle_loss.1} parent=0 // pred_region
    _
  $region17: #{msle_loss.1} parent=0 // pred_fallthru
    _

</llo_original>
